<compile_context>
chip_gen: v7x
topology: tpu7x:2x2x1
jax: 0.10.0
libtpu: 0.0.40
codegen_flags: <defaults>
</compile_context>

<pallas_src>
import functools

import jax
import jax.numpy as jnp
from jax import lax
from jax.experimental import pallas as pl
from jax.experimental.pallas import tpu as pltpu


# Per-block VMEM budget (bytes). Double-buffered in + out -> ~4x this, which
# comfortably fits v5e's 16 MiB scoped default and v7x's 32 MiB / 64 MiB VMEM.
_TARGET_BLOCK_BYTES = 4 * 1024 * 1024
_VMEM_LIMIT_BYTES = 32 * 1024 * 1024


def _pixelnorm_kernel(x_ref, o_ref, *, inv_c, eps):
    # x_ref block: (B_TILE, C, TILE_HW) — always the full channel axis.
    x = x_ref[...].astype(jnp.float32)
    sum_sq = jnp.sum(x * x, axis=1, keepdims=True)          # XLU cross-sublane sum
    inv = lax.rsqrt(sum_sq * inv_c + eps)                    # EUP rsqrt, const 1/C scale
    o_ref[...] = (x * inv).astype(o_ref.dtype)


def _choose_tiling(n, c, hw_pad, itemsize):
    """Pick (b_tile, hw_tile) so b_tile*c*hw_tile*itemsize <= target, lane-dense."""
    image_bytes = c * hw_pad * itemsize
    if image_bytes <= _TARGET_BLOCK_BYTES:
        # Small feature maps: keep full HW per block and batch images per step.
        b_tile = 1
        for d in range(1, n + 1):
            if n % d == 0 and d * image_bytes <= _TARGET_BLOCK_BYTES:
                b_tile = d
        return b_tile, hw_pad
    # Large feature maps: one image per block, tile the lane (HW) axis.
    lane_blocks = hw_pad // 128
    max_lane_blocks = max(1, _TARGET_BLOCK_BYTES // (c * 128 * itemsize))
    best = 1
    for d in range(1, lane_blocks + 1):
        if lane_blocks % d == 0 and d <= max_lane_blocks:
            best = d
    return 1, best * 128


def pixel_norm(x, eps=1e-8):
    """x: (N, C, H, W) -> (N, C, H, W), normalized across C per spatial pos."""
    N, C, H, W = x.shape
    HW = H * W
    HW_pad = ((HW + 127) // 128) * 128

    x3 = x.reshape(N, C, HW)
    if HW_pad != HW:
        # Zero padding is safe: the reduction is per-lane over C, and padded
        # lanes are sliced away afterwards (0 * rsqrt(eps) = 0, no NaNs).
        x3 = jnp.pad(x3, ((0, 0), (0, 0), (0, HW_pad - HW)))

    itemsize = jnp.dtype(x.dtype).itemsize
    b_tile, hw_tile = _choose_tiling(N, C, HW_pad, itemsize)
    grid = (N // b_tile, HW_pad // hw_tile)

    kernel = functools.partial(_pixelnorm_kernel, inv_c=1.0 / C, eps=float(eps))

    out3 = pl.pallas_call(
        kernel,
        out_shape=jax.ShapeDtypeStruct((N, C, HW_pad), x.dtype),
        grid_spec=pltpu.PrefetchScalarGridSpec(
            num_scalar_prefetch=0,
            grid=grid,
            in_specs=[pl.BlockSpec((b_tile, C, hw_tile), lambda n, s: (n, 0, s))],
            out_specs=pl.BlockSpec((b_tile, C, hw_tile), lambda n, s: (n, 0, s)),
        ),
        compiler_params=pltpu.CompilerParams(
            dimension_semantics=("parallel", "parallel"),
            vmem_limit_bytes=_VMEM_LIMIT_BYTES,
        ),
    )(x3)

    if HW_pad != HW:
        out3 = out3[:, :, :HW]
    return out3.reshape(N, C, H, W)


if __name__ == "__main__":
    key = jax.random.PRNGKey(0)
    x = jax.random.normal(key, (2, 4, 16, 16), dtype=jnp.float32)

    y = pixel_norm(x, eps=1e-8)
    y = jax.block_until_ready(y)

    # Reference check in plain JAX.
    ref = x * lax.rsqrt(jnp.mean(x * x, axis=1, keepdims=True) + 1e-8)
    assert y.shape == x.shape and y.dtype == x.dtype
    assert jnp.allclose(y, ref, atol=1e-5, rtol=1e-5)

    print("KERNEL_OK")
</pallas_src>

<mosaic_0001>
module attributes {stable_mosaic.version = 11 : i64} {
  func.func @_pixelnorm_kernel(%arg0: i32, %arg1: i32, %arg2: memref<2x4x256xf32, #tpu.memory_space<vmem>>, %arg3: memref<2x4x256xf32, #tpu.memory_space<vmem>>) attributes {dimension_semantics = [#tpu.dimension_semantics<parallel>, #tpu.dimension_semantics<parallel>], iteration_bounds = array<i64: 1, 1>, scalar_prefetch = 0 : i64, scratch_operands = 0 : i64, tpu.core_type = #tpu.core_type<tc>, window_params = [{transform_indices = @transform_0, window_bounds = array<i64: 2, 4, 256>}, {transform_indices = @transform_1, window_bounds = array<i64: 2, 4, 256>}]} {
    %c0 = arith.constant 0 : index
    %c0_0 = arith.constant 0 : index
    %c0_1 = arith.constant 0 : index
    %0 = vector.load %arg2[%c0, %c0_0, %c0_1] : memref<2x4x256xf32, #tpu.memory_space<vmem>>, vector<2x4x256xf32>
    %1 = arith.mulf %0, %0 : vector<2x4x256xf32>
    %cst = arith.constant dense<0.000000e+00> : vector<2x256xf32>
    %2 = vector.multi_reduction <add>, %1, %cst [1] : vector<2x4x256xf32> to vector<2x256xf32>
    %3 = vector.shape_cast %2 : vector<2x256xf32> to vector<2x1x256xf32>
    %cst_2 = arith.constant 2.500000e-01 : f32
    %4 = vector.broadcast %cst_2 : f32 to vector<2x1x256xf32>
    %5 = arith.mulf %3, %4 : vector<2x1x256xf32>
    %cst_3 = arith.constant 9.99999993E-9 : f32
    %6 = vector.broadcast %cst_3 : f32 to vector<2x1x256xf32>
    %7 = arith.addf %5, %6 : vector<2x1x256xf32>
    %8 = math.rsqrt %7 : vector<2x1x256xf32>
    %9 = vector.broadcast %8 : vector<2x1x256xf32> to vector<2x4x256xf32>
    %10 = arith.mulf %0, %9 : vector<2x4x256xf32>
    %c0_4 = arith.constant 0 : index
    %c0_5 = arith.constant 0 : index
    %c0_6 = arith.constant 0 : index
    %11 = vector.load %arg3[%c0_4, %c0_5, %c0_6] : memref<2x4x256xf32, #tpu.memory_space<vmem>>, vector<2x4x256xf32>
    tpu.vector_store %arg3[%c0_4, %c0_5, %c0_6], %10 {strides = array<i32>} : memref<2x4x256xf32, #tpu.memory_space<vmem>>, vector<2x4x256xf32>,
    return
  }
  func.func @transform_0(%arg0: i32, %arg1: i32) -> (i32, i32, i32) {
    %c0_i32 = arith.constant 0 : i32
    %c0_i32_0 = arith.constant 0 : i32
    return %arg0, %c0_i32, %arg1 : i32, i32, i32
  }
  func.func @transform_1(%arg0: i32, %arg1: i32) -> (i32, i32, i32) {
    %c0_i32 = arith.constant 0 : i32
    %c0_i32_0 = arith.constant 0 : i32
    return %arg0, %c0_i32, %arg1 : i32, i32, i32
  }
}

</mosaic_0001>

<llo_original>
// kernel: tpu_custom_call.1
$region0: #{tpu_custom_call.1}
  #allocation0 [shape = 'u32[]', space=smem, size = 0x4, offset = 0x4, fixed_abs, tag = 'smem constant byte address 0x4 - core index']
  #allocation1 [shape = 'u32[144,128]{1,0:T(1,128)}', space=vmem, size = 0x12000, scoped, tag = 'internal scratch']
  %s0 = inlined_call_operand.hbm [shape: f32[2,4,256], index: 0, kind: input, shape index: {}]
  %s1 = inlined_call_operand.hbm [shape: f32[2,4,256], index: 1, kind: output, shape index: {}]
  %s2 = sld [smem:[#allocation0]]
  $region18: #{tpu_custom_call.1} parent=0
    _
  %s4 = ssub.s32 1, %s2
  %s5 = scalar_select 0, %s4, %s2
  $region1: #{tpu_custom_call.1} parent=0
    #allocation2 [shape = 'u8[8192]{0}', space=vmem, size = 0x2000, scoped, tag = 'input window, operand 0, single buffered']
    #allocation3 [shape = 's32[1]{0}', space=sflag, size = 0x4, scoped, tag = 'scoped memory for tpu_custom_call.1']
    #allocation4 [shape = 's32[1]{0}', space=sflag, size = 0x4, scoped, tag = 'scoped memory for tpu_custom_call.1']
    #allocation5 [shape = 'u8[8192]{0}', space=vmem, size = 0x2000, scoped, tag = 'output window, operand 0, single buffered']
    %6 = vsyncpa [#allocation3], 0
    %7 = vsyncpa [#allocation4], 0
    // Predicated region
    $region2: #{tpu_custom_call.1} parent=1 // pred_check
      _
    $region3: #{tpu_custom_call.1} parent=1 // pred_check_branch
      %9 = sbr.rel (0) target = $region5
    $region4: #{tpu_custom_call.1} parent=1 // pred_region
      %s11 = ssub.s32 256, 256
      %12 = vsyncadd [#allocation3], %s11
      %s13 = sshll.u32 [#allocation2], 4
      %s14 = int_to_ptr.vmem [resolvable:$true] %s13
      %19 = dma.hbm_to_vmem [thread:$0]  %s0, 256, %s14, [#allocation3], 128, 128, 8
    $region5: #{tpu_custom_call.1} parent=1 // pred_fallthru
      _
    // Predicated region
    $region6: #{tpu_custom_call.1} parent=1 // pred_check
      _
    $region7: #{tpu_custom_call.1} parent=1 // pred_check_branch
      %21 = sbr.rel (0) target = $region9
    $region8: #{tpu_custom_call.1} parent=1 // pred_region
      %22 = dma.done [#allocation3], 256
    $region9: #{tpu_custom_call.1} parent=1 // pred_fallthru
      _
    %v23 = vld [vmem:[#allocation2] sm:$0xff]
    %v24 = vld [vmem:[#allocation2 + $0x8] sm:$0xff]
    %v25 = vmul.f32 %v23, %v23
    %v26 = vmul.f32 %v24, %v24
    %v29 = vcombine.high %v25, %v25
    %v30 = vcombine.high %v26, %v26
    %vm33 = vcmask 1043456
    %v34 = vsel %vm33, %v25, 0.0
    %v35 = vrot.slane %v34, 4
    %v36 = vadd.f32 %v34, %v35
    %v37 = vrot.slane %v36, 2
    %v38 = vadd.f32 %v36, %v37
    %v39 = vrot.slane %v38, 1
    %v40 = vadd.f32 %v38, %v39
    %v41 = vsel %vm33, %v29, 0.0
    %v42 = vrot.slane %v41, 4
    %v43 = vadd.f32 %v41, %v42
    %v44 = vrot.slane %v43, 2
    %v45 = vadd.f32 %v43, %v44
    %v46 = vrot.slane %v45, 1
    %v47 = vadd.f32 %v45, %v46
    %v48 = vsel %vm33, %v26, 0.0
    %v49 = vrot.slane %v48, 4
    %v50 = vadd.f32 %v48, %v49
    %v51 = vrot.slane %v50, 2
    %v52 = vadd.f32 %v50, %v51
    %v53 = vrot.slane %v52, 1
    %v54 = vadd.f32 %v52, %v53
    %v55 = vsel %vm33, %v30, 0.0
    %v56 = vrot.slane %v55, 4
    %v57 = vadd.f32 %v55, %v56
    %v58 = vrot.slane %v57, 2
    %v59 = vadd.f32 %v57, %v58
    %v60 = vrot.slane %v59, 1
    %v61 = vadd.f32 %v59, %v60
    %v62 = vmul.f32 %v40, 0.25
    %v63 = vmul.f32 %v47, 0.25
    %v64 = vmul.f32 %v54, 0.25
    %v65 = vmul.f32 %v61, 0.25
    %v66 = vadd.f32 %v62, 1e-08
    %v67 = vadd.f32 %v63, 1e-08
    %v68 = vadd.f32 %v64, 1e-08
    %v69 = vadd.f32 %v65, 1e-08
    %v70 = vrsqrt.pop %v66
    %v71 = vrsqrt.pop %v67
    %v72 = vrsqrt.pop %v68
    %v73 = vrsqrt.pop %v69
    %v78 = vcombine.low %v70, %v71
    %v79 = vcombine.low %v72, %v73
    %v82 = vmul.f32 %v23, %v78
    %v83 = vmul.f32 %v24, %v79
    %84 = vst [vmem:[#allocation5] sm:$0xff] %v82
    %85 = vst [vmem:[#allocation5 + $0x8] sm:$0xff] %v83
    // Predicated region
    $region10: #{tpu_custom_call.1} parent=1 // pred_check
      _
    $region11: #{tpu_custom_call.1} parent=1 // pred_check_branch
      %87 = sbr.rel (0) target = $region13
    $region12: #{tpu_custom_call.1} parent=1 // pred_region
      %s89 = ssub.s32 256, 256
      %90 = vsyncadd [#allocation4], %s89
      %s91 = sshll.u32 [#allocation5], 4
      %s92 = int_to_ptr.vmem [resolvable:$true] %s91
      %97 = dma.vmem_to_hbm [thread:$0]  %s92, 256, %s1, [#allocation4], 128, 128, 8
    $region13: #{tpu_custom_call.1} parent=1 // pred_fallthru
      _
    // Predicated region
    $region14: #{tpu_custom_call.1} parent=1 // pred_check
      _
    $region15: #{tpu_custom_call.1} parent=1 // pred_check_branch
      %99 = sbr.rel (0) target = $region17
    $region16: #{tpu_custom_call.1} parent=1 // pred_region
      %100 = dma.done [#allocation4], 256
    $region17: #{tpu_custom_call.1} parent=1 // pred_fallthru
      _
    %101 = vsyncpa [#allocation3], 1
    %102 = vsyncpa [#allocation4], 1

</llo_original>
